<compile_context>
chip_gen: v7x
topology: tpu7x:2x2x1
jax: 0.10.0
libtpu: 0.0.40
codegen_flags: <defaults>
</compile_context>

<pallas_src>
import functools

import jax
import jax.numpy as jnp
from jax.experimental import pallas as pl
from jax.experimental.pallas import tpu as pltpu


def _hash_keep_mask(seed_u32, shape, col_offset_i32, total_f, threshold_u32):
    """Stateless per-element keep mask: murmur3 fmix32 of (seed, global index)."""
    rows = jax.lax.broadcasted_iota(jnp.int32, shape, 0)
    cols = jax.lax.broadcasted_iota(jnp.int32, shape, 1) + col_offset_i32
    idx = rows * jnp.int32(total_f) + cols          # non-negative global element index
    h = idx.astype(jnp.uint32) + seed_u32 * jnp.uint32(0x9E3779B9)
    h = h ^ (h >> 16)
    h = h * jnp.uint32(0x85EBCA6B)
    h = h ^ (h >> 13)
    h = h * jnp.uint32(0xC2B2AE35)
    h = h ^ (h >> 16)
    return h >= threshold_u32                       # P(keep) = 1 - dropout_rate


def linear_block_kernel(seed_ref, x_ref, w_ref, b_ref, gamma_ref, beta_ref, o_ref,
                        *, negative_slope, dropout_rate, eps,
                        do_batchnorm, do_activation, do_dropout,
                        tile_f, total_f):
    # ---- Linear: MXU matmul in bf16, f32 accumulation ----
    x = x_ref[...].astype(jnp.bfloat16)             # (N, Fin)
    w = w_ref[...].astype(jnp.bfloat16)             # (Fin, TILE_F)
    y = jnp.dot(x, w, preferred_element_type=jnp.float32)   # (N, TILE_F) f32

    if do_batchnorm:
        # Bias add skipped: it is exactly cancelled by the mean subtraction below.
        # ---- BatchNorm1d (training mode: batch statistics, biased variance) ----
        mean = jnp.mean(y, axis=0, keepdims=True)                    # (1, TILE_F)
        var = jnp.mean((y - mean) * (y - mean), axis=0, keepdims=True)
        y = (y - mean) * jax.lax.rsqrt(var + eps)
        y = y * gamma_ref[...] + beta_ref[...]
    else:
        y = y + b_ref[...]

    # ---- LeakyReLU(0.2) ----
    if do_activation:
        y = jnp.where(y >= 0.0, y, negative_slope * y)

    # ---- Dropout (training mode): integer-threshold mask, scale survivors ----
    if do_dropout and dropout_rate > 0.0:
        j = pl.program_id(0)
        seed_u32 = (seed_ref[0] & jnp.int32(0x7FFFFFFF)).astype(jnp.uint32)
        col_off = (j * jnp.int32(tile_f)).astype(jnp.int32)
        thr = jnp.uint32(min(int(round(dropout_rate * 4294967296.0)), 4294967295))
        keep = _hash_keep_mask(seed_u32, y.shape, col_off, total_f, thr)
        inv_keep = jnp.float32(1.0 / (1.0 - dropout_rate))
        y = jnp.where(keep, y * inv_keep, jnp.float32(0.0))

    o_ref[...] = y.astype(o_ref.dtype)


def linear_block(x, w_t, b, gamma, beta, seed, *,
                 dropout=True, dropout_rate=0.2, batchnorm=True, activation=True,
                 negative_slope=0.2, eps=1e-5):
    """x: (N, Fin) f32. w_t: (Fin, Fout). b/gamma/beta: (1, Fout). seed: (1,) int32."""
    N, Fin = x.shape
    Fout = w_t.shape[1]

    # Lane-dense feature tiles: 128-wide when possible, else the full feature dim.
    tile_f = 128 if (Fout % 128 == 0) else Fout
    grid = (Fout // tile_f,)

    kernel = functools.partial(
        linear_block_kernel,
        negative_slope=negative_slope,
        dropout_rate=dropout_rate,
        eps=eps,
        do_batchnorm=batchnorm,
        do_activation=activation,
        do_dropout=dropout,
        tile_f=tile_f,
        total_f=Fout,
    )

    grid_spec = pltpu.PrefetchScalarGridSpec(
        num_scalar_prefetch=1,                      # seed lives in SMEM
        grid=grid,
        in_specs=[
            pl.BlockSpec((N, Fin), lambda j, seed: (0, 0)),        # x (resident)
            pl.BlockSpec((Fin, tile_f), lambda j, seed: (0, j)),   # w_t panel
            pl.BlockSpec((1, tile_f), lambda j, seed: (0, j)),     # bias
            pl.BlockSpec((1, tile_f), lambda j, seed: (0, j)),     # gamma
            pl.BlockSpec((1, tile_f), lambda j, seed: (0, j)),     # beta
        ],
        out_specs=pl.BlockSpec((N, tile_f), lambda j, seed: (0, j)),
    )

    # Explicit VMEM budget from tile arithmetic (double-buffered, generous headroom).
    tile_bytes = 4 * (N * Fin + Fin * tile_f + N * tile_f + 3 * tile_f)
    vmem_limit = int(min(max(4 * tile_bytes, 16 * 1024 * 1024), 100 * 1024 * 1024))

    cost = pl.CostEstimate(
        flops=2 * N * Fin * Fout,
        transcendentals=0,
        bytes_accessed=4 * (N * Fin + Fin * Fout + 3 * Fout + N * Fout),
    )

    return pl.pallas_call(
        kernel,
        out_shape=jax.ShapeDtypeStruct((N, Fout), jnp.float32),
        grid_spec=grid_spec,
        compiler_params=pltpu.CompilerParams(
            dimension_semantics=("parallel",),
            vmem_limit_bytes=vmem_limit,
        ),
        cost_estimate=cost,
    )(seed, x, w_t, b, gamma, beta)


if __name__ == "__main__":
    # Small shapes consistent with the module: a batch of feature vectors.
    # Fout chosen as a 128-multiple so the demo exercises the lane-dense tiling path.
    N, IN_FEATURES, OUT_FEATURES = 8, 64, 256

    key = jax.random.PRNGKey(0)
    kx, kw, kb = jax.random.split(key, 3)

    x = jax.random.normal(kx, (N, IN_FEATURES), dtype=jnp.float32)

    # nn.Linear default init: uniform(-1/sqrt(in_features), 1/sqrt(in_features)).
    bound = 1.0 / (IN_FEATURES ** 0.5)
    w = jax.random.uniform(kw, (OUT_FEATURES, IN_FEATURES), jnp.float32, -bound, bound)
    b = jax.random.uniform(kb, (OUT_FEATURES,), jnp.float32, -bound, bound)
    w_t = jnp.transpose(w)                       # (Fin, Fout) for x @ W^T
    b2 = b.reshape(1, OUT_FEATURES)

    # BatchNorm1d affine params: gamma=1, beta=0 (PyTorch defaults).
    gamma = jnp.ones((1, OUT_FEATURES), jnp.float32)
    beta = jnp.zeros((1, OUT_FEATURES), jnp.float32)

    seed = jnp.array([1234], dtype=jnp.int32)

    # Full forward (with dropout, training mode).
    out = jax.block_until_ready(
        linear_block(x, w_t, b2, gamma, beta, seed,
                     dropout=True, dropout_rate=0.2,
                     batchnorm=True, activation=True))
    assert out.shape == (N, OUT_FEATURES)
    assert bool(jnp.all(jnp.isfinite(out)))
    zero_frac = float(jnp.mean((out == 0.0).astype(jnp.float32)))
    assert 0.05 < zero_frac < 0.5, f"dropout zero fraction off: {zero_frac}"

    # Deterministic path (dropout off) checked against a pure-JAX reference that uses
    # the same bf16-matmul / f32-epilogue recipe.
    out_nodrop = jax.block_until_ready(
        linear_block(x, w_t, b2, gamma, beta, seed,
                     dropout=False, dropout_rate=0.2,
                     batchnorm=True, activation=True))
    y_ref = jnp.dot(x.astype(jnp.bfloat16), w_t.astype(jnp.bfloat16),
                    preferred_element_type=jnp.float32)
    m = jnp.mean(y_ref, axis=0, keepdims=True)
    v = jnp.mean((y_ref - m) ** 2, axis=0, keepdims=True)
    y_ref = (y_ref - m) * jax.lax.rsqrt(v + 1e-5) * gamma + beta
    y_ref = jnp.where(y_ref >= 0.0, y_ref, 0.2 * y_ref)
    assert bool(jnp.allclose(out_nodrop, y_ref, atol=1e-3, rtol=1e-3))

    print("KERNEL_OK")
</pallas_src>

<mosaic_0001>
module attributes {stable_mosaic.version = 11 : i64} {
  func.func @linear_block_kernel(%arg0: i32, %arg1: memref<1xi32, #tpu.memory_space<smem>>, %arg2: memref<8x64xf32, #tpu.memory_space<vmem>>, %arg3: memref<64x128xf32, #tpu.memory_space<vmem>>, %arg4: memref<1x128xf32, #tpu.memory_space<vmem>>, %arg5: memref<1x128xf32, #tpu.memory_space<vmem>>, %arg6: memref<1x128xf32, #tpu.memory_space<vmem>>, %arg7: memref<8x128xf32, #tpu.memory_space<vmem>>) attributes {dimension_semantics = [#tpu.dimension_semantics<parallel>], iteration_bounds = array<i64: 2>, scalar_prefetch = 1 : i64, scratch_operands = 0 : i64, tpu.core_type = #tpu.core_type<tc>, window_params = [{pipeline_mode = #tpu.pipeline_mode<synchronous>, transform_indices = @transform_0, window_bounds = array<i64: 8, 64>}, {transform_indices = @transform_1, window_bounds = array<i64: 64, 128>}, {transform_indices = @transform_2, window_bounds = array<i64: 1, 128>}, {transform_indices = @transform_3, window_bounds = array<i64: 1, 128>}, {transform_indices = @transform_4, window_bounds = array<i64: 1, 128>}, {transform_indices = @transform_5, window_bounds = array<i64: 8, 128>}]} {
    %c0 = arith.constant 0 : index
    %c0_0 = arith.constant 0 : index
    %0 = vector.load %arg2[%c0, %c0_0] : memref<8x64xf32, #tpu.memory_space<vmem>>, vector<8x64xf32>
    %1 = arith.truncf %0 : vector<8x64xf32> to vector<8x64xbf16>
    %c0_1 = arith.constant 0 : index
    %c0_2 = arith.constant 0 : index
    %2 = vector.load %arg3[%c0_1, %c0_2] : memref<64x128xf32, #tpu.memory_space<vmem>>, vector<64x128xf32>
    %3 = arith.truncf %2 : vector<64x128xf32> to vector<64x128xbf16>
    %cst = arith.constant dense<0.000000e+00> : vector<8x128xf32>
    %4 = tpu.matmul %1, %3, %cst {dimension_numbers = #tpu.dot_dimension_numbers<[1], [0], [0], [1], [0, 0, 1, 1], [], []>} : vector<8x64xbf16>, vector<64x128xbf16>, vector<8x128xf32> -> vector<8x128xf32>
    %cst_3 = arith.constant dense<0.000000e+00> : vector<128xf32>
    %5 = vector.multi_reduction <add>, %4, %cst_3 [0] : vector<8x128xf32> to vector<128xf32>
    %6 = vector.shape_cast %5 : vector<128xf32> to vector<1x128xf32>
    %cst_4 = arith.constant 8.000000e+00 : f32
    %7 = vector.broadcast %cst_4 : f32 to vector<1x128xf32>
    %8 = arith.divf %6, %7 : vector<1x128xf32>
    %9 = vector.broadcast %8 : vector<1x128xf32> to vector<8x128xf32>
    %10 = arith.subf %4, %9 : vector<8x128xf32>
    %11 = vector.broadcast %8 : vector<1x128xf32> to vector<8x128xf32>
    %12 = arith.subf %4, %11 : vector<8x128xf32>
    %13 = arith.mulf %10, %12 : vector<8x128xf32>
    %cst_5 = arith.constant dense<0.000000e+00> : vector<128xf32>
    %14 = vector.multi_reduction <add>, %13, %cst_5 [0] : vector<8x128xf32> to vector<128xf32>
    %15 = vector.shape_cast %14 : vector<128xf32> to vector<1x128xf32>
    %cst_6 = arith.constant 8.000000e+00 : f32
    %16 = vector.broadcast %cst_6 : f32 to vector<1x128xf32>
    %17 = arith.divf %15, %16 : vector<1x128xf32>
    %18 = vector.broadcast %8 : vector<1x128xf32> to vector<8x128xf32>
    %19 = arith.subf %4, %18 : vector<8x128xf32>
    %cst_7 = arith.constant 9.99999974E-6 : f32
    %20 = vector.broadcast %cst_7 : f32 to vector<1x128xf32>
    %21 = arith.addf %17, %20 : vector<1x128xf32>
    %22 = math.rsqrt %21 : vector<1x128xf32>
    %23 = vector.broadcast %22 : vector<1x128xf32> to vector<8x128xf32>
    %24 = arith.mulf %19, %23 : vector<8x128xf32>
    %c0_8 = arith.constant 0 : index
    %c0_9 = arith.constant 0 : index
    %25 = vector.load %arg5[%c0_8, %c0_9] : memref<1x128xf32, #tpu.memory_space<vmem>>, vector<1x128xf32>
    %26 = vector.broadcast %25 : vector<1x128xf32> to vector<8x128xf32>
    %27 = arith.mulf %24, %26 : vector<8x128xf32>
    %c0_10 = arith.constant 0 : index
    %c0_11 = arith.constant 0 : index
    %28 = vector.load %arg6[%c0_10, %c0_11] : memref<1x128xf32, #tpu.memory_space<vmem>>, vector<1x128xf32>
    %29 = vector.broadcast %28 : vector<1x128xf32> to vector<8x128xf32>
    %30 = arith.addf %27, %29 : vector<8x128xf32>
    %cst_12 = arith.constant 0.000000e+00 : f32
    %31 = vector.broadcast %cst_12 : f32 to vector<8x128xf32>
    %32 = arith.cmpf oge, %30, %31 : vector<8x128xf32>
    %cst_13 = arith.constant 2.000000e-01 : f32
    %33 = vector.broadcast %cst_13 : f32 to vector<8x128xf32>
    %34 = arith.mulf %33, %30 : vector<8x128xf32>
    %35 = arith.select %32, %30, %34 : vector<8x128xi1>, vector<8x128xf32>
    %c0_14 = arith.constant 0 : index
    %36 = memref.load %arg1[%c0_14] : memref<1xi32, #tpu.memory_space<smem>>
    %c2147483647_i32 = arith.constant 2147483647 : i32
    %37 = arith.andi %36, %c2147483647_i32 : i32
    %c128_i32 = arith.constant 128 : i32
    %38 = arith.muli %arg0, %c128_i32 : i32
    %39 = tpu.iota {dimensions = array<i32: 0>} : vector<8x128xi32>
    %40 = tpu.iota {dimensions = array<i32: 1>} : vector<8x128xi32>
    %41 = vector.broadcast %38 : i32 to vector<8x128xi32>
    %42 = arith.addi %40, %41 : vector<8x128xi32>
    %c256_i32 = arith.constant 256 : i32
    %43 = vector.broadcast %c256_i32 : i32 to vector<8x128xi32>
    %44 = arith.muli %39, %43 : vector<8x128xi32>
    %45 = arith.addi %44, %42 : vector<8x128xi32>
    %c-1640531527_i32 = arith.constant -1640531527 : i32
    %46 = arith.muli %37, %c-1640531527_i32 : i32
    %47 = vector.broadcast %46 : i32 to vector<8x128xi32>
    %48 = arith.addi %45, %47 : vector<8x128xi32>
    %c16_i32 = arith.constant 16 : i32
    %49 = vector.broadcast %c16_i32 : i32 to vector<8x128xi32>
    %50 = arith.shrui %48, %49 : vector<8x128xi32>
    %51 = arith.xori %48, %50 : vector<8x128xi32>
    %c-2048144789_i32 = arith.constant -2048144789 : i32
    %52 = vector.broadcast %c-2048144789_i32 : i32 to vector<8x128xi32>
    %53 = arith.muli %51, %52 : vector<8x128xi32>
    %c13_i32 = arith.constant 13 : i32
    %54 = vector.broadcast %c13_i32 : i32 to vector<8x128xi32>
    %55 = arith.shrui %53, %54 : vector<8x128xi32>
    %56 = arith.xori %53, %55 : vector<8x128xi32>
    %c-1028477387_i32 = arith.constant -1028477387 : i32
    %57 = vector.broadcast %c-1028477387_i32 : i32 to vector<8x128xi32>
    %58 = arith.muli %56, %57 : vector<8x128xi32>
    %c16_i32_15 = arith.constant 16 : i32
    %59 = vector.broadcast %c16_i32_15 : i32 to vector<8x128xi32>
    %60 = arith.shrui %58, %59 : vector<8x128xi32>
    %61 = arith.xori %58, %60 : vector<8x128xi32>
    %c858993459_i32 = arith.constant 858993459 : i32
    %62 = vector.broadcast %c858993459_i32 : i32 to vector<8x128xi32>
    %63 = arith.cmpi uge, %61, %62 : vector<8x128xi32>
    %cst_16 = arith.constant 1.250000e+00 : f32
    %64 = vector.broadcast %cst_16 : f32 to vector<8x128xf32>
    %65 = arith.mulf %35, %64 : vector<8x128xf32>
    %cst_17 = arith.constant 0.000000e+00 : f32
    %66 = vector.broadcast %cst_17 : f32 to vector<8x128xf32>
    %67 = arith.select %63, %65, %66 : vector<8x128xi1>, vector<8x128xf32>
    %c0_18 = arith.constant 0 : index
    %c0_19 = arith.constant 0 : index
    %68 = vector.load %arg7[%c0_18, %c0_19] : memref<8x128xf32, #tpu.memory_space<vmem>>, vector<8x128xf32>
    tpu.vector_store %arg7[%c0_18, %c0_19], %67 {strides = array<i32>} : memref<8x128xf32, #tpu.memory_space<vmem>>, vector<8x128xf32>,
    return
  }
  func.func @transform_0(%arg0: i32, %arg1: memref<1xi32, #tpu.memory_space<smem>>) -> (i32, i32) {
    %c0_i32 = arith.constant 0 : i32
    %c0_i32_0 = arith.constant 0 : i32
    %c0_i32_1 = arith.constant 0 : i32
    return %c0_i32, %c0_i32_0 : i32, i32
  }
  func.func @transform_1(%arg0: i32, %arg1: memref<1xi32, #tpu.memory_space<smem>>) -> (i32, i32) {
    %c0_i32 = arith.constant 0 : i32
    %c0_i32_0 = arith.constant 0 : i32
    return %c0_i32, %arg0 : i32, i32
  }
  func.func @transform_2(%arg0: i32, %arg1: memref<1xi32, #tpu.memory_space<smem>>) -> (i32, i32) {
    %c0_i32 = arith.constant 0 : i32
    %c0_i32_0 = arith.constant 0 : i32
    return %c0_i32, %arg0 : i32, i32
  }
  func.func @transform_3(%arg0: i32, %arg1: memref<1xi32, #tpu.memory_space<smem>>) -> (i32, i32) {
    %c0_i32 = arith.constant 0 : i32
    %c0_i32_0 = arith.constant 0 : i32
    return %c0_i32, %arg0 : i32, i32
  }
  func.func @transform_4(%arg0: i32, %arg1: memref<1xi32, #tpu.memory_space<smem>>) -> (i32, i32) {
    %c0_i32 = arith.constant 0 : i32
    %c0_i32_0 = arith.constant 0 : i32
    return %c0_i32, %arg0 : i32, i32
  }
  func.func @transform_5(%arg0: i32, %arg1: memref<1xi32, #tpu.memory_space<smem>>) -> (i32, i32) {
    %c0_i32 = arith.constant 0 : i32
    %c0_i32_0 = arith.constant 0 : i32
    return %c0_i32, %arg0 : i32, i32
  }
}

</mosaic_0001>

<llo_original>
// kernel: tpu_custom_call.1
$region0: #{tpu_custom_call.1}
  #allocation0 [shape = 'u32[]', space=smem, size = 0x4, offset = 0x4, fixed_abs, tag = 'smem constant byte address 0x4 - core index']
  #allocation1 [shape = 'u32[144,128]{1,0:T(1,128)}', space=vmem, size = 0x12000, scoped, tag = 'internal scratch']
  #allocation2 [shape = 's32[1]{0}', space=sflag, size = 0x4, scoped, tag = 'scoped memory for tpu_custom_call.1']
  #allocation3 [shape = 's32[1]{0:T(128)S(6)}', space=smem, size = 0x200, scoped, tag = 'prefetched SMEM operand 0']
  %s0 = inlined_call_operand.<no memory space> [shape: s32[1], index: 0, kind: input, shape index: {}]
  %s1 = inlined_call_operand.hbm [shape: f32[8,64], index: 1, kind: input, shape index: {}]
  %s2 = inlined_call_operand.hbm [shape: f32[64,256], index: 2, kind: input, shape index: {}]
  %s3 = inlined_call_operand.vmem [shape: f32[1,256], index: 3, kind: input, shape index: {}]
  %s4 = inlined_call_operand.vmem [shape: f32[1,256], index: 4, kind: input, shape index: {}]
  %s5 = inlined_call_operand.vmem [shape: f32[1,256], index: 5, kind: input, shape index: {}]
  %s6 = inlined_call_operand.hbm [shape: f32[8,256], index: 6, kind: output, shape index: {}]
  %s7 = sld [smem:[#allocation0]]
  $region61: #{tpu_custom_call.1} parent=0
    _
  %s9 = ssub.s32 1, %s7
  %s10 = scalar_select 0, %s9, %s7
  %11 = sst [smem:[#allocation3]] %s0
  $region1: #{tpu_custom_call.1} parent=0
    #allocation4 [shape = 'u8[4096]{0}', space=vmem, size = 0x1000, scoped, tag = 'input window, operand 1, single buffered']
    #allocation5 [shape = 's32[2]{0}', space=sflag, size = 0x8, scoped, tag = 'scoped memory for tpu_custom_call.1']
    #allocation6 [shape = 's32[2]{0}', space=sflag, size = 0x8, scoped, tag = 'scoped memory for tpu_custom_call.1']
    #allocation7 [shape = 'u8[65536]{0}', space=vmem, size = 0x10000, scoped, tag = 'input window, operand 2']
    #allocation8 [shape = 's32[2]{0}', space=sflag, size = 0x8, scoped, tag = 'scoped memory for tpu_custom_call.1']
    #allocation9 [shape = 'u8[8192]{0}', space=vmem, size = 0x2000, scoped, tag = 'output window, operand 0']
    %12 = vsyncpa [#allocation5], 0
    %13 = vsyncpa [#allocation8], 0
    %s14 = scalar_lea.sflag [#allocation8], 1
    %15 = vsyncpa %s14, 0
    %16 = vsyncpa [#allocation6], 0
    %s17 = scalar_lea.sflag [#allocation6], 1
    %18 = vsyncpa %s17, 0
    loop: start=0, step=1, limit=4
    $region2: #{tpu_custom_call.1} parent=1 // loop_pre_header
      _
    $region3: #{tpu_custom_call.1} parent=1 // loop_header
      %s20 = sphi 0, %s24
      %p21 = scmp.ge.s32.totalorder %s20, 4
      %s28 = sphi 0, %s28
      %s30 = sphi 0, %s28
      %s31 = sphi 0, %s30
      %s45 = sphi 0, %s31
      %s51 = sphi 0, %s53
      %s54 = sphi 0, %s51
      %s55 = sphi 0, %s54
      %s71 = sphi 0, %s55
      %s77 = sphi 0, %s79
      %s80 = sphi 0, %s77
      %s81 = sphi 0, %s80
      %s97 = sphi 0, %s81
      %s103 = sphi 0, %s105
      %s106 = sphi 0, %s103
      %s107 = sphi 0, %s106
      %s123 = sphi 0, %s107
      %s129 = sphi 0, %s131
      %s132 = sphi 0, %s129
      %s133 = sphi 0, %s132
      %s149 = sphi 0, %s133
      %s155 = sphi 0, %s157
      %s158 = sphi 0, %s155
      %s159 = sphi 0, %s158
      %s175 = sphi 0, %s159
    $region4: #{tpu_custom_call.1} parent=1 // loop_header_branch
      %23 = sbr.rel (%p21) target = $region8
    $region5: #{tpu_custom_call.1} parent=1 // loop_body
      %s25 = ssub.s32 %s20, 1
      %s26 = ssub.s32 %s20, 2
      %s27 = sadd.s32 %s20, 1
      %s29 = sadd.s32 %s28, 1
      %p32 = scmp.eq.s32.totalorder %s20, 1
      %p33 = scmp.ne.s32.totalorder %s28, %s30
      %p34 = scmp.eq.s32.totalorder %s20, 0
      %p35 = por %p33, %p34
      %p36 = scmp.ne.s32.totalorder %s28, %s30
      %p37 = scmp.eq.s32.totalorder %s25, 1
      %p38 = por %p36, %p37
      %p39 = scmp.ne.s32.totalorder %s30, %s31
      %p40 = scmp.eq.s32.totalorder %s25, 0
      %p41 = por %p39, %p40
      %p42 = scmp.ne.s32.totalorder %s30, %s31
      %p43 = scmp.eq.s32.totalorder %s26, 1
      %p44 = por %p42, %p43
      %p46 = scmp.ne.s32.totalorder %s31, %s45
      %p47 = scmp.eq.s32.totalorder %s26, 0
      %p48 = por %p46, %p47
      %s49 = ssub.s32 %s20, %s27
      %p50 = scmp.eq.s32.totalorder %s49, 0
      %s52 = sadd.s32 %s51, 1
      %s53 = scalar_select %p50, %s51, %s52
      %p56 = pneg %p50
      %p57 = scmp.eq.s32.totalorder %s20, 1
      %p58 = por %p56, %p57
      %p59 = scmp.ne.s32.totalorder %s51, %s54
      %p60 = scmp.eq.s32.totalorder %s20, 0
      %p61 = por %p59, %p60
      %p62 = scmp.ne.s32.totalorder %s51, %s54
      %p63 = scmp.eq.s32.totalorder %s25, 1
      %p64 = por %p62, %p63
      %p65 = scmp.ne.s32.totalorder %s54, %s55
      %p66 = scmp.eq.s32.totalorder %s25, 0
      %p67 = por %p65, %p66
      %p68 = scmp.ne.s32.totalorder %s54, %s55
      %p69 = scmp.eq.s32.totalorder %s26, 1
      %p70 = por %p68, %p69
      %p72 = scmp.ne.s32.totalorder %s55, %s71
      %p73 = scmp.eq.s32.totalorder %s26, 0
      %p74 = por %p72, %p73
      %s75 = ssub.s32 %s20, %s27
      %p76 = scmp.eq.s32.totalorder %s75, 0
      %s78 = sadd.s32 %s77, 1
      %s79 = scalar_select %p76, %s77, %s78
      %p82 = pneg %p76
      %p83 = scmp.eq.s32.totalorder %s20, 1
      %p84 = por %p82, %p83
      %p85 = scmp.ne.s32.totalorder %s77, %s80
      %p86 = scmp.eq.s32.totalorder %s20, 0
      %p87 = por %p85, %p86
      %p88 = scmp.ne.s32.totalorder %s77, %s80
      %p89 = scmp.eq.s32.totalorder %s25, 1
      %p90 = por %p88, %p89
      %p91 = scmp.ne.s32.totalorder %s80, %s81
      %p92 = scmp.eq.s32.totalorder %s25, 0
      %p93 = por %p91, %p92
      %p94 = scmp.ne.s32.totalorder %s80, %s81
      %p95 = scmp.eq.s32.totalorder %s26, 1
      %p96 = por %p94, %p95
      %p98 = scmp.ne.s32.totalorder %s81, %s97
      %p99 = scmp.eq.s32.totalorder %s26, 0
      %p100 = por %p98, %p99
      %s101 = ssub.s32 %s20, %s27
      %p102 = scmp.eq.s32.totalorder %s101, 0
      %s104 = sadd.s32 %s103, 1
      %s105 = scalar_select %p102, %s103, %s104
      %p108 = pneg %p102
      %p109 = scmp.eq.s32.totalorder %s20, 1
      %p110 = por %p108, %p109
      %p111 = scmp.ne.s32.totalorder %s103, %s106
      %p112 = scmp.eq.s32.totalorder %s20, 0
      %p113 = por %p111, %p112
      %p114 = scmp.ne.s32.totalorder %s103, %s106
      %p115 = scmp.eq.s32.totalorder %s25, 1
      %p116 = por %p114, %p115
      %p117 = scmp.ne.s32.totalorder %s106, %s107
      %p118 = scmp.eq.s32.totalorder %s25, 0
      %p119 = por %p117, %p118
      %p120 = scmp.ne.s32.totalorder %s106, %s107
      %p121 = scmp.eq.s32.totalorder %s26, 1
      %p122 = por %p120, %p121
      %p124 = scmp.ne.s32.totalorder %s107, %s123
      %p125 = scmp.eq.s32.totalorder %s26, 0
      %p126 = por %p124, %p125
      %s127 = ssub.s32 %s20, %s27
      %p128 = scmp.eq.s32.totalorder %s127, 0
      %s130 = sadd.s32 %s129, 1
      %s131 = scalar_select %p128, %s129, %s130
      %p134 = pneg %p128
      %p135 = scmp.eq.s32.totalorder %s20, 1
      %p136 = por %p134, %p135
      %p137 = scmp.ne.s32.totalorder %s129, %s132
      %p138 = scmp.eq.s32.totalorder %s20, 0
      %p139 = por %p137, %p138
      %p140 = scmp.ne.s32.totalorder %s129, %s132
      %p141 = scmp.eq.s32.totalorder %s25, 1
      %p142 = por %p140, %p141
      %p143 = scmp.ne.s32.totalorder %s132, %s133
      %p144 = scmp.eq.s32.totalorder %s25, 0
      %p145 = por %p143, %p144
      %p146 = scmp.ne.s32.totalorder %s132, %s133
      %p147 = scmp.eq.s32.totalorder %s26, 1
      %p148 = por %p146, %p147
      %p150 = scmp.ne.s32.totalorder %s133, %s149
      %p151 = scmp.eq.s32.totalorder %s26, 0
      %p152 = por %p150, %p151
      %s153 = ssub.s32 %s20, %s27
      %p154 = scmp.eq.s32.totalorder %s153, 0
      %s156 = sadd.s32 %s155, 1
      %s157 = scalar_select %p154, %s155, %s156
      %p160 = pneg %p154
      %p161 = scmp.eq.s32.totalorder %s20, 1
      %p162 = por %p160, %p161
      %p163 = scmp.ne.s32.totalorder %s155, %s158
      %p164 = scmp.eq.s32.totalorder %s20, 0
      %p165 = por %p163, %p164
      %p166 = scmp.ne.s32.totalorder %s155, %s158
      %p167 = scmp.eq.s32.totalorder %s25, 1
      %p168 = por %p166, %p167
      %p169 = scmp.ne.s32.totalorder %s158, %s159
      %p170 = scmp.eq.s32.totalorder %s25, 0
      %p171 = por %p169, %p170
      %p172 = scmp.ne.s32.totalorder %s158, %s159
      %p173 = scmp.eq.s32.totalorder %s26, 1
      %p174 = por %p172, %p173
      %p176 = scmp.ne.s32.totalorder %s159, %s175
      %p177 = scmp.eq.s32.totalorder %s26, 0
      %p178 = por %p176, %p177
      %p179 = scmp.le.s32.totalorder 1, %s20
      %p180 = scmp.lt.s32.totalorder %s20, 3
      %p181 = pnand %p179, %p180
      %p182 = pneg %p181
      // Predicated region
      $region9: #{tpu_custom_call.1} parent=5 // pred_check
        _
      $region10: #{tpu_custom_call.1} parent=5 // pred_check_branch
        %184 = sbr.rel (%p181) target = $region12
      $region11: #{tpu_custom_call.1} parent=5 // pred_region
        %s185 = ssub.s32 %s20, 1
        // Predicated region
        $region13: #{tpu_custom_call.1} parent=11 // pred_check
          %p186 = pneg %p41
        $region14: #{tpu_custom_call.1} parent=11 // pred_check_branch
          %188 = sbr.rel (%p186) target = $region16
        $region15: #{tpu_custom_call.1} parent=11 // pred_region
          %s190 = ssub.s32 128, 128
          %191 = vsyncadd [#allocation5], %s190
          %s193 = sshll.u32 [#allocation4], 4
          %s194 = int_to_ptr.vmem [resolvable:$true] %s193
          %196 = dma.hbm_to_vmem [thread:$0]  %s1, 128, %s194, [#allocation5]
        $region16: #{tpu_custom_call.1} parent=11 // pred_fallthru
          _
      $region12: #{tpu_custom_call.1} parent=5 // pred_fallthru
        _
      %p197 = scmp.lt.s32.totalorder %s20, 2
      // Predicated region
      $region17: #{tpu_custom_call.1} parent=5 // pred_check
        %p198 = pneg %p197
      $region18: #{tpu_custom_call.1} parent=5 // pred_check_branch
        %200 = sbr.rel (%p198) target = $region20
      $region19: #{tpu_custom_call.1} parent=5 // pred_region
        // Predicated region
        $region21: #{tpu_custom_call.1} parent=19 // pred_check
          %p201 = pneg %p61
        $region22: #{tpu_custom_call.1} parent=19 // pred_check_branch
          %203 = sbr.rel (%p201) target = $region24
        $region23: #{tpu_custom_call.1} parent=19 // pred_region
          %s204 = sand.u32 %s51, 1
          %s205 = scalar_lea.sflag [#allocation8], %s204
          %s206 = sand.u32 %s51, 1
          %s207 = smul.addr %s206, 64
          %s208 = scalar_lea.vmem [#allocation7], %s207
          %s210 = ssub.s32 1024, 1024
          %211 = vsyncadd %s205, %s210
          %s212 = smul.addr %s20, 128
          %s213 = scalar_lea.hbm %s2, %s212
          %s214 = sshll.u32 %s208, 4
          %s215 = int_to_ptr.vmem [resolvable:$true] %s214
          %220 = dma.hbm_to_vmem [thread:$0]  %s213, 1024, %s215, %s205, 256, 128, 8
        $region24: #{tpu_custom_call.1} parent=19 // pred_fallthru
          _
        // Predicated region
        $region25: #{tpu_custom_call.1} parent=19 // pred_check
          %p221 = pneg %p87
        $region26: #{tpu_custom_call.1} parent=19 // pred_check_branch
          %223 = sbr.rel (%p221) target = $region28
        $region27: #{tpu_custom_call.1} parent=19 // pred_region
          %p224 = scmp.lt.s32.totalorder %s20, 1
          %s225 = scalar_select %p224, %s20, 1
          %s226 = scalar_lea.vmem %s3, %s225
        $region28: #{tpu_custom_call.1} parent=19 // pred_fallthru
          _
        // Predicated region
        $region29: #{tpu_custom_call.1} parent=19 // pred_check
          %p227 = pneg %p113
        $region30: #{tpu_custom_call.1} parent=19 // pred_check_branch
          %229 = sbr.rel (%p227) target = $region32
        $region31: #{tpu_custom_call.1} parent=19 // pred_region
          %p230 = scmp.lt.s32.totalorder %s20, 1
          %s231 = scalar_select %p230, %s20, 1
          %s232 = scalar_lea.vmem %s4, %s231
        $region32: #{tpu_custom_call.1} parent=19 // pred_fallthru
          _
        // Predicated region
        $region33: #{tpu_custom_call.1} parent=19 // pred_check
          %p233 = pneg %p139
        $region34: #{tpu_custom_call.1} parent=19 // pred_check_branch
          %235 = sbr.rel (%p233) target = $region36
        $region35: #{tpu_custom_call.1} parent=19 // pred_region
          %p236 = scmp.lt.s32.totalorder %s20, 1
          %s237 = scalar_select %p236, %s20, 1
          %s238 = scalar_lea.vmem %s5, %s237
        $region36: #{tpu_custom_call.1} parent=19 // pred_fallthru
          _
      $region20: #{tpu_custom_call.1} parent=5 // pred_fallthru
        _
      %p239 = scmp.le.s32.totalorder 1, %s20
      %p240 = scmp.lt.s32.totalorder %s20, 3
      %p241 = pnand %p239, %p240
      %p242 = pneg %p241
      // Predicated region
      $region37: #{tpu_custom_call.1} parent=5 // pred_check
        _
      $region38: #{tpu_custom_call.1} parent=5 // pred_check_branch
        %244 = sbr.rel (%p241) target = $region40
      $region39: #{tpu_custom_call.1} parent=5 // pred_region
        %s245 = ssub.s32 %s20, 1
        // Predicated region
        $region41: #{tpu_custom_call.1} parent=39 // pred_check
          %p246 = pneg %p41
        $region42: #{tpu_custom_call.1} parent=39 // pred_check_branch
          %248 = sbr.rel (%p246) target = $region44
        $region43: #{tpu_custom_call.1} parent=39 // pred_region
          %249 = dma.done [#allocation5], 128
        $region44: #{tpu_custom_call.1} parent=39 // pred_fallthru
          _
        %s250 = sand.u32 %s54, 1
        %s251 = scalar_lea.sflag [#allocation8], %s250
        %s252 = sand.u32 %s54, 1
        %s253 = smul.addr %s252, 64
        %s254 = scalar_lea.vmem [#allocation7], %s253
        // Predicated region
        $region45: #{tpu_custom_call.1} parent=39 // pred_check
          %p255 = pneg %p67
        $region46: #{tpu_custom_call.1} parent=39 // pred_check_branch
          %257 = sbr.rel (%p255) target = $region48
        $region47: #{tpu_custom_call.1} parent=39 // pred_region
          %258 = dma.done %s251, 1024
        $region48: #{tpu_custom_call.1} parent=39 // pred_fallthru
          _
        %p259 = pneg %p41
        %p260 = pneg %p38
        %s261 = sand.u32 %s54, 1
        %s262 = scalar_lea.sflag [#allocation8], %s261
        %s263 = sand.u32 %s54, 1
        %s264 = smul.addr %s263, 64
        %s265 = scalar_lea.vmem [#allocation7], %s264
        %p266 = pneg %p67
        %p267 = pneg %p64
        %p268 = scmp.lt.s32.totalorder %s25, 1
        %s269 = scalar_select %p268, %s25, 1
        %s270 = scalar_lea.vmem %s3, %s269
        %p271 = pneg %p93
        %p272 = pneg %p90
        %p273 = scmp.lt.s32.totalorder %s25, 1
        %s274 = scalar_select %p273, %s25, 1
        %s275 = scalar_lea.vmem %s4, %s274
        %p276 = pneg %p119
        %p277 = pneg %p116
        %p278 = scmp.lt.s32.totalorder %s25, 1
        %s279 = scalar_select %p278, %s25, 1
        %s280 = scalar_lea.vmem %s5, %s279
        %p281 = pneg %p145
        %p282 = pneg %p142
        %p283 = pneg %p171
        %p284 = pneg %p168
        %s285 = sand.u32 %s158, 1
        %s286 = scalar_lea.sflag [#allocation6], %s285
        %s287 = sand.u32 %s158, 1
        %s288 = smul.addr %s287, 8
        %s289 = scalar_lea.vmem [#allocation9], %s288
        %p290 = scmp.lt.s32.totalorder %s25, 1
        %s291 = scalar_select %p290, %s25, 1
        %s292 = scalar_lea.vmem %s3, %s291
        %p293 = scmp.lt.s32.totalorder %s25, 1
        %s294 = scalar_select %p293, %s25, 1
        %s295 = scalar_lea.vmem %s4, %s294
        %p296 = scmp.lt.s32.totalorder %s25, 1
        %s297 = scalar_select %p296, %s25, 1
        %s298 = scalar_lea.vmem %s5, %s297
        %v300 = vld [vmem:[#allocation4] sm:$0xff]
        %v301 = vpack.c.bf16 %v300, %v300
        %v302 = vld [vmem:[%s254] sm:$0xff]
        %v303 = vld [vmem:[%s254 + $0x8] sm:$0xff]
        %v304 = vld [vmem:[%s254 + $0x10] sm:$0xff]
        %v305 = vld [vmem:[%s254 + $0x18] sm:$0xff]
        %v306 = vld [vmem:[%s254 + $0x20] sm:$0xff]
        %v307 = vld [vmem:[%s254 + $0x28] sm:$0xff]
        %v308 = vld [vmem:[%s254 + $0x30] sm:$0xff]
        %v309 = vld [vmem:[%s254 + $0x38] sm:$0xff]
        %v310 = vpack.c.bf16 %v303, %v302
        %v311 = vpack.c.bf16 %v305, %v304
        %v312 = vpack.c.bf16 %v307, %v306
        %v313 = vpack.c.bf16 %v309, %v308
        %vm314 = vcmask 523264
        %v316 = vsel %vm314, %v301, 0
        %318 = vmatprep.subr.bf16.mxu0 0
        %319 = vmatpush1.bf16.msra.mxu0 %v310
        %320 = vmatprep.subr.bf16.mxu0 0
        %321 = vmatpush1.bf16.msra.mxu0 %v311
        %322 = vmatprep.subr.bf16.mxu0 0
        %323 = vmatpush1.bf16.msra.mxu0 %v312
        %324 = vmatprep.subr.bf16.mxu0 0
        %325 = vmatpush1.bf16.msra.mxu0 %v313
        %326 = vmatprep.subr.bf16.mxu0 0
        %327 = vmatpush1.bf16.msra.mxu0 0
        %328 = vmatprep.subr.bf16.mxu0 0
        %329 = vmatpush1.bf16.msra.mxu0 0
        %330 = vmatprep.subr.bf16.mxu0 0
        %331 = vmatpush1.bf16.msra.mxu0 0
        %332 = vmatprep.subr.bf16.mxu0 0
        %333 = vmatpush1.bf16.msra.mxu0 0
        %334 = vmatprep.subr.bf16.mxu0 0
        %335 = vmatpush1.bf16.msra.mxu0 0
        %336 = vmatprep.subr.bf16.mxu0 0
        %337 = vmatpush1.bf16.msra.mxu0 0
        %338 = vmatprep.subr.bf16.mxu0 0
        %339 = vmatpush1.bf16.msra.mxu0 0
        %340 = vmatprep.subr.bf16.mxu0 0
        %341 = vmatpush1.bf16.msra.mxu0 0
        %342 = vmatprep.subr.bf16.mxu0 0
        %343 = vmatpush1.bf16.msra.mxu0 0
        %344 = vmatprep.subr.bf16.mxu0 0
        %345 = vmatpush1.bf16.msra.mxu0 0
        %346 = vmatprep.subr.bf16.mxu0 0
        %347 = vmatpush1.bf16.msra.mxu0 0
        %348 = vmatprep.subr.bf16.mxu0 0
        %349 = vmatpush1.bf16.msra.mxu0 0
        %350 = vmatprep.mubr.bf16.mxu0 0
        %351 = vmatmul.mubr.bf16.gmra.mrb[0].mxu0 %v316
        %v352 = vpop.f32.mrb[0].mxu0
        %v353 = vadd.f32 0.0, %v352
        %v354 = vpop.f32.mrb[0].mxu0
        %v355 = vpop.f32.mrb[0].mxu0
        %v356 = vpop.f32.mrb[0].mxu0
        %357 = vdwg.mxu0
        %v358 = vrot.slane %v353, 4
        %v359 = vadd.f32 %v353, %v358
        %v360 = vrot.slane %v359, 2
        %v361 = vadd.f32 %v359, %v360
        %v362 = vrot.slane %v361, 1
        %v363 = vadd.f32 %v361, %v362
        %v364 = vrcp.pop 8.0
        %v365 = vmul.f32 %v363, %v364
        %v366 = vsub.f32 %v353, %v365
        %v367 = vmul.f32 %v366, %v366
        %v368 = vrot.slane %v367, 4
        %v369 = vadd.f32 %v367, %v368
        %v370 = vrot.slane %v369, 2
        %v371 = vadd.f32 %v369, %v370
        %v372 = vrot.slane %v371, 1
        %v373 = vadd.f32 %v371, %v372
        %v374 = vmul.f32 %v373, %v364
        %v375 = vadd.f32 %v374, 1e-05
        %v376 = vrsqrt.pop %v375
        %v377 = vmul.f32 %v366, %v376
        %v378 = vld [vmem:[%s295] sm:$0x1]
        %v380 = vlaneseq
        %v381 = vshrl.u32 %v380, 7
        %v382 = vsub.s32 0, %v381
        %v383 = vrot.slane %v378, %v382
        %v385 = vmul.f32 %v377, %v383
        %v386 = vld [vmem:[%s298] sm:$0x1]
        %v388 = vlaneseq
        %v389 = vshrl.u32 %v388, 7
        %v390 = vsub.s32 0, %v389
        %v391 = vrot.slane %v386, %v390
        %v393 = vadd.f32 %v385, %v391
        %vm394 = vcmp.ge.f32.partialorder %v393, 0.0
        %v395 = vmul.f32 %v393, 0.2
        %v396 = vsel %vm394, %v393, %v395
        %s397 = sld [smem:[#allocation3]]
        %s398 = sand.u32 %s397, 2147483647
        %s399 = smul.u32 %s25, 128
        %v400 = vlaneseq
        %v401 = vshrl.u32 %v400, 7
        %v402 = vlaneseq
        %v403 = vand.u32 %v402, 127
        %v404 = vstv %s399
        %v405 = vadd.s32 %v403, %v404
        %v406 = vmul.u32 %v401, 256
        %v407 = vadd.s32 %v406, %v405
        %s408 = smul.u32 %s398, 2654435769
        %v409 = vstv %s408
        %v410 = vadd.s32 %v407, %v409
        %v411 = vshrl.u32 %v410, 16
        %v412 = vxor.u32 %v410, %v411
        %v413 = vmul.u32 %v412, 2246822507
        %v414 = vshrl.u32 %v413, 13
        %v415 = vxor.u32 %v413, %v414
        %v416 = vmul.u32 %v415, 3266489909
        %v417 = vshrl.u32 %v416, 16
        %v418 = vxor.u32 %v416, %v417
        %vm419 = vcmp.ge.u32.totalorder %v418, 858993459
        %v420 = vmul.f32 %v396, 1.25
        %v421 = vsel %vm419, %v420, 0.0
        %422 = vst [vmem:[%s289] sm:$0xff] %v421
        %s423 = sand.u32 %s158, 1
        %s424 = scalar_lea.sflag [#allocation6], %s423
        %s425 = sand.u32 %s158, 1
        %s426 = smul.addr %s425, 8
        %s427 = scalar_lea.vmem [#allocation9], %s426
        // Predicated region
        $region49: #{tpu_custom_call.1} parent=39 // pred_check
          %p428 = pneg %p168
        $region50: #{tpu_custom_call.1} parent=39 // pred_check_branch
          %430 = sbr.rel (%p428) target = $region52
        $region51: #{tpu_custom_call.1} parent=39 // pred_region
          %s432 = ssub.s32 128, 128
          %433 = vsyncadd %s424, %s432
          %s434 = smul.addr %s25, 128
          %s435 = scalar_lea.hbm %s6, %s434
          %s437 = sshll.u32 %s427, 4
          %s438 = int_to_ptr.vmem [resolvable:$true] %s437
          %440 = dma.vmem_to_hbm [thread:$0]  %s438, 128, %s435, %s424
        $region52: #{tpu_custom_call.1} parent=39 // pred_fallthru
          _
      $region40: #{tpu_custom_call.1} parent=5 // pred_fallthru
        _
      %p441 = scmp.le.s32.totalorder 2, %s20
      // Predicated region
      $region53: #{tpu_custom_call.1} parent=5 // pred_check
        %p442 = pneg %p441
      $region54: #{tpu_custom_call.1} parent=5 // pred_check_branch
        %444 = sbr.rel (%p442) target = $region56
      $region55: #{tpu_custom_call.1} parent=5 // pred_region
        %s445 = ssub.s32 %s20, 2
        // Predicated region
        $region57: #{tpu_custom_call.1} parent=55 // pred_check
          %p446 = pneg %p174
        $region58: #{tpu_custom_call.1} parent=55 // pred_check_branch
          %448 = sbr.rel (%p446) target = $region60
        $region59: #{tpu_custom_call.1} parent=55 // pred_region
          %s449 = sand.u32 %s159, 1
          %s450 = scalar_lea.sflag [#allocation6], %s449
          %s451 = sand.u32 %s159, 1
          %s452 = smul.addr %s451, 8
          %s453 = scalar_lea.vmem [#allocation9], %s452
          %454 = dma.done %s450, 128
        $region60: #{tpu_custom_call.1} parent=55 // pred_fallthru
          _
      $region56: #{tpu_custom_call.1} parent=5 // pred_fallthru
        _
    $region6: #{tpu_custom_call.1} parent=1 // loop_footer
      %s24 = sadd.s32 1, %s20
    $region7: #{tpu_custom_call.1} parent=1 // loop_footer_branch
      %19 = sbr.rel target = $region3
    $region8: #{tpu_custom_call.1} parent=1 // loop_exit
      _
    %455 = vsyncpa [#allocation5], 1
    %s456 = scalar_lea.sflag [#allocation5], 1
    %457 = vsyncpa %s456, 1
    %458 = vsyncpa [#allocation8], 1
    %s459 = scalar_lea.sflag [#allocation8], 1
    %460 = vsyncpa %s459, 1
    %461 = vsyncpa [#allocation6], 1
    %s462 = scalar_lea.sflag [#allocation6], 1
    %463 = vsyncpa %s462, 1

</llo_original>
